<compile_context>
chip_gen: v6e
topology: v6e:2x2x1
jax: 0.10.0
libtpu: 0.0.40
codegen_flags: <defaults>
</compile_context>

<pallas_src>
import jax
import jax.numpy as jnp
from jax.experimental import pallas as pl
from jax.experimental.pallas import tpu as pltpu

HIDDEN_SIZE = 32      # small, consistent with the module (original uses 256)
OUTPUT_SIZE = 64      # vocab size
MAX_LENGTH = 10
BATCH = 8             # independent sequences batched on the sublane axis
DTYPE = jnp.float32

_H = HIDDEN_SIZE
_L = MAX_LENGTH
_V = OUTPUT_SIZE
_B = BATCH

# Packed lane-dense per-step output: [log_probs (V) | h_new (H) | attn_w (L) | pad]
_OUT_W = 128
assert _V + _H + _L <= _OUT_W

_CE_OFF = 128                 # lane-aligned column offset of the W_ce block in slab1
_SLAB1_W = _CE_OFF + _H       # 160


def _decoder_kernel(ids_ref,                       # SMEM (T, B) int32 (scalar prefetch)
                    emb_ref, w1_ref, wg_ref, wo_ref, wca_ref, enc_ref, h0_ref,
                    out_ref,
                    h_scr, encp_scr):
    f32 = jnp.float32
    H, L, V, B = _H, _L, _V, _B
    t = pl.program_id(0)

    @pl.when(t == 0)
    def _():
        # hidden-state carry + step-invariant encoder projection (enc @ W_ca)
        h_scr[...] = h0_ref[...]
        encp_scr[...] = jnp.dot(enc_ref[...], wca_ref[...],
                                preferred_element_type=f32)

    hid = h_scr[...]                                                  # (B, H)

    # --- embedding gather: one-hot (B,V) @ (V,H), token ids from SMEM scalars.
    # TODO(synk): nn.Dropout(p=0.1) on the embedding is identity (eval mode).
    lane_v = jax.lax.broadcasted_iota(jnp.int32, (1, V), 1)
    onehot = jnp.concatenate(
        [(lane_v == ids_ref[t, b]).astype(f32) for b in range(B)], axis=0)
    emb = jnp.dot(onehot, emb_ref[...], preferred_element_type=f32)   # (B, H)

    ones = jnp.ones((B, 1), f32)

    # --- dot 1: fused [attn scores | emb @ W_ce + b_c], biases absorbed.
    lhs1 = jnp.concatenate([emb, hid, ones], axis=-1)                 # (B, 2H+1)
    d1 = jnp.dot(lhs1, w1_ref[...], preferred_element_type=f32)       # (B, 160)
    scores = d1[:, 0:L]
    pre_ce = d1[:, _CE_OFF:_CE_OFF + H]

    # --- attention softmax (exact divide: off the MXU critical path).
    m = jnp.max(scores, axis=-1, keepdims=True)
    e = jnp.exp(scores - m)
    attn_w = e / jnp.sum(e, axis=-1, keepdims=True)                   # (B, L)

    # --- (attn_w @ enc) @ W_ca  ==  block_diag(attn_w) @ (enc @ W_ca)
    lane_bl = jax.lax.broadcasted_iota(jnp.int32, (B, B * L), 1)
    sub_bl = jax.lax.broadcasted_iota(jnp.int32, (B, B * L), 0)
    in_blk = (lane_bl >= sub_bl * L) & (lane_bl < sub_bl * L + L)
    aw_blk = jnp.where(in_blk, jnp.concatenate([attn_w] * B, axis=-1), 0.0)
    ap_proj = jnp.dot(aw_blk, encp_scr[...], preferred_element_type=f32)  # (B, H)

    x = jnp.maximum(pre_ce + ap_proj, 0.0)                            # (B, H)

    # --- GRU step: one fused (B,2H+1)@(2H+1,4H) dot, cols [r | z | gi_n | gh_n].
    g = jnp.dot(jnp.concatenate([x, hid, ones], axis=-1), wg_ref[...],
                preferred_element_type=f32)                           # (B, 4H)
    r = jax.nn.sigmoid(g[:, 0:H])
    z = jax.nn.sigmoid(g[:, H:2 * H])
    n = jnp.tanh(g[:, 2 * H:3 * H] + r * g[:, 3 * H:4 * H])
    h_new = (1.0 - z) * n + z * hid                                   # (B, H)
    h_scr[...] = h_new

    # --- output projection + log_softmax.
    logits = jnp.dot(jnp.concatenate([h_new, ones], axis=-1), wo_ref[...],
                     preferred_element_type=f32)                      # (B, V)
    m2 = jnp.max(logits, axis=-1, keepdims=True)
    lse = m2 + jnp.log(jnp.sum(jnp.exp(logits - m2), axis=-1, keepdims=True))
    logp = logits - lse

    # single lane-dense packed store: [logp | h_new | attn_w | pad]
    pad = jnp.zeros((B, _OUT_W - (V + H + L)), f32)
    out_ref[...] = jnp.concatenate([logp, h_new, attn_w, pad], axis=-1)[None]


def init_params(key, hidden_size=HIDDEN_SIZE, output_size=OUTPUT_SIZE,
                max_length=MAX_LENGTH):
    """Deterministic parameters, stored already-transposed: (in, out)."""
    ks = jax.random.split(key, 12)
    s = 0.1
    p = {
        "embedding": jax.random.normal(ks[0], (output_size, hidden_size), DTYPE),
        # attn: Linear(2H -> max_length); split into emb / hidden halves.
        "wa_e": s * jax.random.normal(ks[1], (hidden_size, max_length), DTYPE),
        "wa_h": s * jax.random.normal(ks[2], (hidden_size, max_length), DTYPE),
        "ba":   s * jax.random.normal(ks[3], (1, max_length), DTYPE),
        # attn_combine: Linear(2H -> H); split into emb / attn_applied halves.
        "wc_e": s * jax.random.normal(ks[4], (hidden_size, hidden_size), DTYPE),
        "wc_a": s * jax.random.normal(ks[5], (hidden_size, hidden_size), DTYPE),
        "bc":   s * jax.random.normal(ks[6], (1, hidden_size), DTYPE),
        # GRU(H -> H), gates r, z, n; each (H, H) + bias (1, H).
        "w_ih": s * jax.random.normal(ks[7], (3, hidden_size, hidden_size), DTYPE),
        "b_ih": s * jax.random.normal(ks[8], (3, 1, hidden_size), DTYPE),
        "w_hh": s * jax.random.normal(ks[9], (3, hidden_size, hidden_size), DTYPE),
        "b_hh": s * jax.random.normal(ks[10], (3, 1, hidden_size), DTYPE),
        # out: Linear(H -> output_size).
        "wo": s * jax.random.normal(ks[11], (hidden_size, output_size), DTYPE),
        "bo": jnp.zeros((1, output_size), DTYPE),
    }
    return p


def pack_params(p):
    """Host-side one-time packing into MXU-ready slabs (bias in the last row)."""
    H, L = _H, _L
    f32 = DTYPE
    # slab1 (2H+1, 160): cols [0:L] = attn (emb rows | hid rows | bias b_a),
    # cols [L:128] = zero pad, cols [128:160] = W_ce (emb rows) + bias b_c.
    attn_cols = jnp.concatenate([p["wa_e"], p["wa_h"], p["ba"]], axis=0)      # (65, L)
    ce_cols = jnp.concatenate([p["wc_e"], jnp.zeros((H, H), f32), p["bc"]],
                              axis=0)                                          # (65, H)
    pad_cols = jnp.zeros((2 * H + 1, _CE_OFF - L), f32)
    slab1 = jnp.concatenate([attn_cols, pad_cols, ce_cols], axis=1)            # (65, 160)

    # slab_gru (2H+1, 4H): cols [r | z | gi_n | gh_n]; LHS rows are [x | h | 1].
    def _gate(wi, wh, b):
        return jnp.concatenate([wi, wh, b], axis=0)                            # (65, H)
    r_cols = _gate(p["w_ih"][0], p["w_hh"][0], p["b_ih"][0] + p["b_hh"][0])
    z_cols = _gate(p["w_ih"][1], p["w_hh"][1], p["b_ih"][1] + p["b_hh"][1])
    gin_cols = _gate(p["w_ih"][2], jnp.zeros((H, H), f32), p["b_ih"][2])
    ghn_cols = _gate(jnp.zeros((H, H), f32), p["w_hh"][2], p["b_hh"][2])
    slab_gru = jnp.concatenate([r_cols, z_cols, gin_cols, ghn_cols], axis=1)   # (65, 128)

    # slab_out (H+1, V): W_o with b_o in the last row.
    slab_out = jnp.concatenate([p["wo"], p["bo"]], axis=0)                     # (33, 64)
    return slab1, slab_gru, slab_out


@jax.jit
def attn_decoder_forward(embedding, slab1, slab_gru, slab_out, wc_a,
                         token_ids, hidden0, encoder_outputs):
    """Run T teacher-forced AttnDecoderRNN.forward steps in one pallas_call.

    token_ids:        (T, B) int32 input token id of each step / sequence
    hidden0:          (1, B, H) initial GRU hidden state
    encoder_outputs:  (B, L, H) per-sequence encoder outputs
    Returns (log_probs (T,B,V), hidden (T,B,H), attn_weights (T,B,L)).
    """
    T, B = token_ids.shape
    H, L, V = _H, _L, _V
    assert B == _B
    h0 = hidden0.reshape(B, H)
    enc2d = encoder_outputs.reshape(B * L, H)

    const = lambda t, ids: (0, 0)   # weight/state blocks: resident across steps
    grid_spec = pltpu.PrefetchScalarGridSpec(
        num_scalar_prefetch=1,
        grid=(T,),
        in_specs=[
            pl.BlockSpec((V, H), const),                 # embedding table
            pl.BlockSpec((2 * H + 1, _SLAB1_W), const),  # [attn | W_ce] slab
            pl.BlockSpec((2 * H + 1, 4 * H), const),     # fused GRU slab
            pl.BlockSpec((H + 1, V), const),             # output-projection slab
            pl.BlockSpec((H, H), const),                 # W_ca
            pl.BlockSpec((B * L, H), const),             # encoder outputs
            pl.BlockSpec((B, H), const),                 # initial hidden
        ],
        out_specs=pl.BlockSpec((1, B, _OUT_W), lambda t, ids: (t, 0, 0)),
        scratch_shapes=[pltpu.VMEM((B, H), DTYPE),       # hidden-state carry
                        pltpu.VMEM((B * L, H), DTYPE)],  # enc @ W_ca (step-invariant)
    )
    out = pl.pallas_call(
        _decoder_kernel,
        out_shape=jax.ShapeDtypeStruct((T, B, _OUT_W), DTYPE),
        grid_spec=grid_spec,
        compiler_params=pltpu.CompilerParams(
            dimension_semantics=("arbitrary",)),          # sequential recurrence
    )(token_ids, embedding, slab1, slab_gru, slab_out, wc_a, enc2d, h0)

    log_probs = out[:, :, 0:V]
    hidden_seq = out[:, :, V:V + H]
    attn_weights = out[:, :, V + H:V + H + L]
    return log_probs, hidden_seq, attn_weights


def _reference_forward(params, token_ids, hidden0, encoder_outputs):
    """Pure-JAX reference: T sequential applications of the PyTorch forward (eval)."""
    T, B = token_ids.shape
    H = _H
    h = hidden0.reshape(B, H)
    lps, hs, aws = [], [], []
    for t in range(T):
        emb = params["embedding"][token_ids[t]]                        # (B, H)
        scores = emb @ params["wa_e"] + h @ params["wa_h"] + params["ba"]
        aw = jax.nn.softmax(scores, axis=-1)
        ap = jnp.einsum('bl,blh->bh', aw, encoder_outputs)
        x = jax.nn.relu(emb @ params["wc_e"] + ap @ params["wc_a"] + params["bc"])
        r = jax.nn.sigmoid(x @ params["w_ih"][0] + params["b_ih"][0]
                           + h @ params["w_hh"][0] + params["b_hh"][0])
        z = jax.nn.sigmoid(x @ params["w_ih"][1] + params["b_ih"][1]
                           + h @ params["w_hh"][1] + params["b_hh"][1])
        n = jnp.tanh(x @ params["w_ih"][2] + params["b_ih"][2]
                     + r * (h @ params["w_hh"][2] + params["b_hh"][2]))
        h = (1.0 - z) * n + z * h
        logits = h @ params["wo"] + params["bo"]
        lps.append(jax.nn.log_softmax(logits, axis=-1))
        hs.append(h)
        aws.append(aw)
    return jnp.stack(lps), jnp.stack(hs), jnp.stack(aws)


if __name__ == "__main__":
    key = jax.random.PRNGKey(0)
    kp, kh, ke, ki = jax.random.split(key, 4)

    params = init_params(kp)
    slab1, slab_gru, slab_out = pack_params(params)      # packed once, host-side

    T, B = 6, BATCH
    token_ids = jax.random.randint(ki, (T, B), 0, OUTPUT_SIZE, dtype=jnp.int32)
    hidden0 = 0.1 * jax.random.normal(kh, (1, B, HIDDEN_SIZE), DTYPE)
    encoder_outputs = jax.random.normal(ke, (B, MAX_LENGTH, HIDDEN_SIZE), DTYPE)

    log_probs, hidden_seq, attn_weights = attn_decoder_forward(
        params["embedding"], slab1, slab_gru, slab_out, params["wc_a"],
        token_ids, hidden0, encoder_outputs)
    jax.block_until_ready((log_probs, hidden_seq, attn_weights))

    ref_lp, ref_h, ref_aw = _reference_forward(
        params, token_ids, hidden0, encoder_outputs)

    assert log_probs.shape == (T, B, OUTPUT_SIZE)
    assert hidden_seq.shape == (T, B, HIDDEN_SIZE)
    assert attn_weights.shape == (T, B, MAX_LENGTH)
    assert jnp.allclose(log_probs, ref_lp, atol=2e-3)
    assert jnp.allclose(hidden_seq, ref_h, atol=2e-3)
    assert jnp.allclose(attn_weights, ref_aw, atol=2e-3)

    print("KERNEL_OK")
</pallas_src>

<mosaic_0001>
module attributes {stable_mosaic.version = 11 : i64} {
  func.func @_decoder_kernel(%arg0: i32, %arg1: memref<6x8xi32, #tpu.memory_space<smem>>, %arg2: memref<64x32xf32, #tpu.memory_space<vmem>>, %arg3: memref<65x160xf32, #tpu.memory_space<vmem>>, %arg4: memref<65x128xf32, #tpu.memory_space<vmem>>, %arg5: memref<33x64xf32, #tpu.memory_space<vmem>>, %arg6: memref<32x32xf32, #tpu.memory_space<vmem>>, %arg7: memref<80x32xf32, #tpu.memory_space<vmem>>, %arg8: memref<8x32xf32, #tpu.memory_space<vmem>>, %arg9: memref<1x8x128xf32, #tpu.memory_space<vmem>>, %arg10: memref<8x32xf32, #tpu.memory_space<vmem>>, %arg11: memref<80x32xf32, #tpu.memory_space<vmem>>) attributes {dimension_semantics = [#tpu.dimension_semantics<arbitrary>], iteration_bounds = array<i64: 6>, scalar_prefetch = 1 : i64, scratch_operands = 2 : i64, tpu.core_type = #tpu.core_type<tc>, window_params = [{pipeline_mode = #tpu.pipeline_mode<synchronous>, transform_indices = @transform_0, window_bounds = array<i64: 64, 32>}, {pipeline_mode = #tpu.pipeline_mode<synchronous>, transform_indices = @transform_1, window_bounds = array<i64: 65, 160>}, {pipeline_mode = #tpu.pipeline_mode<synchronous>, transform_indices = @transform_2, window_bounds = array<i64: 65, 128>}, {pipeline_mode = #tpu.pipeline_mode<synchronous>, transform_indices = @transform_3, window_bounds = array<i64: 33, 64>}, {pipeline_mode = #tpu.pipeline_mode<synchronous>, transform_indices = @transform_4, window_bounds = array<i64: 32, 32>}, {pipeline_mode = #tpu.pipeline_mode<synchronous>, transform_indices = @transform_5, window_bounds = array<i64: 80, 32>}, {pipeline_mode = #tpu.pipeline_mode<synchronous>, transform_indices = @transform_6, window_bounds = array<i64: 8, 32>}, {transform_indices = @transform_7, window_bounds = array<i64: 1, 8, 128>}]} {
    %c0_i32 = arith.constant 0 : i32
    %0 = arith.cmpi eq, %arg0, %c0_i32 : i32
    %1 = arith.extui %0 : i1 to i32
    %c0_i32_0 = arith.constant 0 : i32
    %2 = arith.cmpi ne, %1, %c0_i32_0 : i32
    scf.if %2 {
      %c0_35 = arith.constant 0 : index
      %c0_36 = arith.constant 0 : index
      %134 = vector.load %arg8[%c0_35, %c0_36] : memref<8x32xf32, #tpu.memory_space<vmem>>, vector<8x32xf32>
      %c0_37 = arith.constant 0 : index
      %c0_38 = arith.constant 0 : index
      %135 = vector.load %arg10[%c0_37, %c0_38] : memref<8x32xf32, #tpu.memory_space<vmem>>, vector<8x32xf32>
      tpu.vector_store %arg10[%c0_37, %c0_38], %134 {strides = array<i32>} : memref<8x32xf32, #tpu.memory_space<vmem>>, vector<8x32xf32>,
      %c0_39 = arith.constant 0 : index
      %c0_40 = arith.constant 0 : index
      %136 = vector.load %arg7[%c0_39, %c0_40] : memref<80x32xf32, #tpu.memory_space<vmem>>, vector<80x32xf32>
      %c0_41 = arith.constant 0 : index
      %c0_42 = arith.constant 0 : index
      %137 = vector.load %arg6[%c0_41, %c0_42] : memref<32x32xf32, #tpu.memory_space<vmem>>, vector<32x32xf32>
      %cst_43 = arith.constant dense<0.000000e+00> : vector<80x32xf32>
      %138 = tpu.matmul %136, %137, %cst_43 {dimension_numbers = #tpu.dot_dimension_numbers<[1], [0], [0], [1], [0, 0, 1, 1], [], []>} : vector<80x32xf32>, vector<32x32xf32>, vector<80x32xf32> -> vector<80x32xf32>
      %c0_44 = arith.constant 0 : index
      %c0_45 = arith.constant 0 : index
      %139 = vector.load %arg11[%c0_44, %c0_45] : memref<80x32xf32, #tpu.memory_space<vmem>>, vector<80x32xf32>
      tpu.vector_store %arg11[%c0_44, %c0_45], %138 {strides = array<i32>} : memref<80x32xf32, #tpu.memory_space<vmem>>, vector<80x32xf32>,
    } else {
    }
    %c0 = arith.constant 0 : index
    %c0_1 = arith.constant 0 : index
    %3 = vector.load %arg10[%c0, %c0_1] : memref<8x32xf32, #tpu.memory_space<vmem>>, vector<8x32xf32>
    %4 = tpu.iota {dimensions = array<i32: 1>} : vector<1x64xi32>
    %5 = arith.index_cast %arg0 : i32 to index
    %c0_2 = arith.constant 0 : index
    %6 = memref.load %arg1[%5, %c0_2] : memref<6x8xi32, #tpu.memory_space<smem>>
    %7 = vector.broadcast %6 : i32 to vector<1x64xi32>
    %8 = arith.cmpi eq, %4, %7 : vector<1x64xi32>
    %9 = arith.extui %8 : vector<1x64xi1> to vector<1x64xi32>
    %10 = arith.sitofp %9 : vector<1x64xi32> to vector<1x64xf32>
    %11 = arith.index_cast %arg0 : i32 to index
    %c1 = arith.constant 1 : index
    %12 = memref.load %arg1[%11, %c1] : memref<6x8xi32, #tpu.memory_space<smem>>
    %13 = vector.broadcast %12 : i32 to vector<1x64xi32>
    %14 = arith.cmpi eq, %4, %13 : vector<1x64xi32>
    %15 = arith.extui %14 : vector<1x64xi1> to vector<1x64xi32>
    %16 = arith.sitofp %15 : vector<1x64xi32> to vector<1x64xf32>
    %17 = arith.index_cast %arg0 : i32 to index
    %c2 = arith.constant 2 : index
    %18 = memref.load %arg1[%17, %c2] : memref<6x8xi32, #tpu.memory_space<smem>>
    %19 = vector.broadcast %18 : i32 to vector<1x64xi32>
    %20 = arith.cmpi eq, %4, %19 : vector<1x64xi32>
    %21 = arith.extui %20 : vector<1x64xi1> to vector<1x64xi32>
    %22 = arith.sitofp %21 : vector<1x64xi32> to vector<1x64xf32>
    %23 = arith.index_cast %arg0 : i32 to index
    %c3 = arith.constant 3 : index
    %24 = memref.load %arg1[%23, %c3] : memref<6x8xi32, #tpu.memory_space<smem>>
    %25 = vector.broadcast %24 : i32 to vector<1x64xi32>
    %26 = arith.cmpi eq, %4, %25 : vector<1x64xi32>
    %27 = arith.extui %26 : vector<1x64xi1> to vector<1x64xi32>
    %28 = arith.sitofp %27 : vector<1x64xi32> to vector<1x64xf32>
    %29 = arith.index_cast %arg0 : i32 to index
    %c4 = arith.constant 4 : index
    %30 = memref.load %arg1[%29, %c4] : memref<6x8xi32, #tpu.memory_space<smem>>
    %31 = vector.broadcast %30 : i32 to vector<1x64xi32>
    %32 = arith.cmpi eq, %4, %31 : vector<1x64xi32>
    %33 = arith.extui %32 : vector<1x64xi1> to vector<1x64xi32>
    %34 = arith.sitofp %33 : vector<1x64xi32> to vector<1x64xf32>
    %35 = arith.index_cast %arg0 : i32 to index
    %c5 = arith.constant 5 : index
    %36 = memref.load %arg1[%35, %c5] : memref<6x8xi32, #tpu.memory_space<smem>>
    %37 = vector.broadcast %36 : i32 to vector<1x64xi32>
    %38 = arith.cmpi eq, %4, %37 : vector<1x64xi32>
    %39 = arith.extui %38 : vector<1x64xi1> to vector<1x64xi32>
    %40 = arith.sitofp %39 : vector<1x64xi32> to vector<1x64xf32>
    %41 = arith.index_cast %arg0 : i32 to index
    %c6 = arith.constant 6 : index
    %42 = memref.load %arg1[%41, %c6] : memref<6x8xi32, #tpu.memory_space<smem>>
    %43 = vector.broadcast %42 : i32 to vector<1x64xi32>
    %44 = arith.cmpi eq, %4, %43 : vector<1x64xi32>
    %45 = arith.extui %44 : vector<1x64xi1> to vector<1x64xi32>
    %46 = arith.sitofp %45 : vector<1x64xi32> to vector<1x64xf32>
    %47 = arith.index_cast %arg0 : i32 to index
    %c7 = arith.constant 7 : index
    %48 = memref.load %arg1[%47, %c7] : memref<6x8xi32, #tpu.memory_space<smem>>
    %49 = vector.broadcast %48 : i32 to vector<1x64xi32>
    %50 = arith.cmpi eq, %4, %49 : vector<1x64xi32>
    %51 = arith.extui %50 : vector<1x64xi1> to vector<1x64xi32>
    %52 = arith.sitofp %51 : vector<1x64xi32> to vector<1x64xf32>
    %53 = tpu.concatenate %10, %16, %22, %28, %34, %40, %46, %52 in 0 : vector<1x64xf32>, vector<1x64xf32>, vector<1x64xf32>, vector<1x64xf32>, vector<1x64xf32>, vector<1x64xf32>, vector<1x64xf32>, vector<1x64xf32> -> vector<8x64xf32>
    %c0_3 = arith.constant 0 : index
    %c0_4 = arith.constant 0 : index
    %54 = vector.load %arg2[%c0_3, %c0_4] : memref<64x32xf32, #tpu.memory_space<vmem>>, vector<64x32xf32>
    %cst = arith.constant dense<0.000000e+00> : vector<8x32xf32>
    %55 = tpu.matmul %53, %54, %cst {dimension_numbers = #tpu.dot_dimension_numbers<[1], [0], [0], [1], [0, 0, 1, 1], [], []>} : vector<8x64xf32>, vector<64x32xf32>, vector<8x32xf32> -> vector<8x32xf32>
    %cst_5 = arith.constant 1.000000e+00 : f32
    %56 = vector.broadcast %cst_5 : f32 to vector<8x1xf32>
    %57 = tpu.concatenate %55, %3, %56 in 1 : vector<8x32xf32>, vector<8x32xf32>, vector<8x1xf32> -> vector<8x65xf32>
    %c0_6 = arith.constant 0 : index
    %c0_7 = arith.constant 0 : index
    %58 = vector.load %arg3[%c0_6, %c0_7] : memref<65x160xf32, #tpu.memory_space<vmem>>, vector<65x160xf32>
    %cst_8 = arith.constant dense<0.000000e+00> : vector<8x160xf32>
    %59 = tpu.matmul %57, %58, %cst_8 {dimension_numbers = #tpu.dot_dimension_numbers<[1], [0], [0], [1], [0, 0, 1, 1], [], []>} : vector<8x65xf32>, vector<65x160xf32>, vector<8x160xf32> -> vector<8x160xf32>
    %60 = vector.extract_strided_slice %59 {offsets = [0, 0], sizes = [8, 10], strides = [1, 1]} : vector<8x160xf32> to vector<8x10xf32>
    %61 = vector.extract_strided_slice %59 {offsets = [0, 128], sizes = [8, 32], strides = [1, 1]} : vector<8x160xf32> to vector<8x32xf32>
    %cst_9 = arith.constant dense<0xFF800000> : vector<8xf32>
    %62 = vector.multi_reduction <maximumf>, %60, %cst_9 [1] : vector<8x10xf32> to vector<8xf32>
    %63 = vector.shape_cast %62 : vector<8xf32> to vector<8x1xf32>
    %64 = vector.broadcast %63 : vector<8x1xf32> to vector<8x10xf32>
    %65 = arith.subf %60, %64 : vector<8x10xf32>
    %66 = math.exp %65 : vector<8x10xf32>
    %cst_10 = arith.constant dense<0.000000e+00> : vector<8xf32>
    %67 = vector.multi_reduction <add>, %66, %cst_10 [1] : vector<8x10xf32> to vector<8xf32>
    %68 = vector.shape_cast %67 : vector<8xf32> to vector<8x1xf32>
    %69 = vector.broadcast %68 : vector<8x1xf32> to vector<8x10xf32>
    %70 = arith.divf %66, %69 : vector<8x10xf32>
    %71 = tpu.iota {dimensions = array<i32: 1>} : vector<8x80xi32>
    %72 = tpu.iota {dimensions = array<i32: 0>} : vector<8x80xi32>
    %c10_i32 = arith.constant 10 : i32
    %73 = vector.broadcast %c10_i32 : i32 to vector<8x80xi32>
    %74 = arith.muli %72, %73 : vector<8x80xi32>
    %75 = arith.cmpi sge, %71, %74 : vector<8x80xi32>
    %c10_i32_11 = arith.constant 10 : i32
    %76 = vector.broadcast %c10_i32_11 : i32 to vector<8x80xi32>
    %77 = arith.muli %72, %76 : vector<8x80xi32>
    %c10_i32_12 = arith.constant 10 : i32
    %78 = vector.broadcast %c10_i32_12 : i32 to vector<8x80xi32>
    %79 = arith.addi %77, %78 : vector<8x80xi32>
    %80 = arith.cmpi slt, %71, %79 : vector<8x80xi32>
    %81 = arith.andi %75, %80 : vector<8x80xi1>
    %82 = tpu.concatenate %70, %70, %70, %70, %70, %70, %70, %70 in 1 : vector<8x10xf32>, vector<8x10xf32>, vector<8x10xf32>, vector<8x10xf32>, vector<8x10xf32>, vector<8x10xf32>, vector<8x10xf32>, vector<8x10xf32> -> vector<8x80xf32>
    %cst_13 = arith.constant 0.000000e+00 : f32
    %83 = vector.broadcast %cst_13 : f32 to vector<8x80xf32>
    %84 = arith.select %81, %82, %83 : vector<8x80xi1>, vector<8x80xf32>
    %c0_14 = arith.constant 0 : index
    %c0_15 = arith.constant 0 : index
    %85 = vector.load %arg11[%c0_14, %c0_15] : memref<80x32xf32, #tpu.memory_space<vmem>>, vector<80x32xf32>
    %cst_16 = arith.constant dense<0.000000e+00> : vector<8x32xf32>
    %86 = tpu.matmul %84, %85, %cst_16 {dimension_numbers = #tpu.dot_dimension_numbers<[1], [0], [0], [1], [0, 0, 1, 1], [], []>} : vector<8x80xf32>, vector<80x32xf32>, vector<8x32xf32> -> vector<8x32xf32>
    %87 = arith.addf %61, %86 : vector<8x32xf32>
    %cst_17 = arith.constant 0.000000e+00 : f32
    %88 = vector.broadcast %cst_17 : f32 to vector<8x32xf32>
    %89 = arith.maximumf %87, %88 : vector<8x32xf32>
    %90 = tpu.concatenate %89, %3, %56 in 1 : vector<8x32xf32>, vector<8x32xf32>, vector<8x1xf32> -> vector<8x65xf32>
    %c0_18 = arith.constant 0 : index
    %c0_19 = arith.constant 0 : index
    %91 = vector.load %arg4[%c0_18, %c0_19] : memref<65x128xf32, #tpu.memory_space<vmem>>, vector<65x128xf32>
    %cst_20 = arith.constant dense<0.000000e+00> : vector<8x128xf32>
    %92 = tpu.matmul %90, %91, %cst_20 {dimension_numbers = #tpu.dot_dimension_numbers<[1], [0], [0], [1], [0, 0, 1, 1], [], []>} : vector<8x65xf32>, vector<65x128xf32>, vector<8x128xf32> -> vector<8x128xf32>
    %93 = vector.extract_strided_slice %92 {offsets = [0, 0], sizes = [8, 32], strides = [1, 1]} : vector<8x128xf32> to vector<8x32xf32>
    %94 = arith.negf %93 : vector<8x32xf32>
    %95 = math.exp %94 : vector<8x32xf32>
    %cst_21 = arith.constant 1.000000e+00 : f32
    %96 = vector.broadcast %cst_21 : f32 to vector<8x32xf32>
    %97 = arith.addf %96, %95 : vector<8x32xf32>
    %98 = arith.divf %96, %97 : vector<8x32xf32>
    %99 = vector.extract_strided_slice %92 {offsets = [0, 32], sizes = [8, 32], strides = [1, 1]} : vector<8x128xf32> to vector<8x32xf32>
    %100 = arith.negf %99 : vector<8x32xf32>
    %101 = math.exp %100 : vector<8x32xf32>
    %cst_22 = arith.constant 1.000000e+00 : f32
    %102 = vector.broadcast %cst_22 : f32 to vector<8x32xf32>
    %103 = arith.addf %102, %101 : vector<8x32xf32>
    %104 = arith.divf %102, %103 : vector<8x32xf32>
    %105 = vector.extract_strided_slice %92 {offsets = [0, 64], sizes = [8, 32], strides = [1, 1]} : vector<8x128xf32> to vector<8x32xf32>
    %106 = vector.extract_strided_slice %92 {offsets = [0, 96], sizes = [8, 32], strides = [1, 1]} : vector<8x128xf32> to vector<8x32xf32>
    %107 = arith.mulf %98, %106 : vector<8x32xf32>
    %108 = arith.addf %105, %107 : vector<8x32xf32>
    %109 = math.tanh %108 : vector<8x32xf32>
    %cst_23 = arith.constant 1.000000e+00 : f32
    %110 = vector.broadcast %cst_23 : f32 to vector<8x32xf32>
    %111 = arith.subf %110, %104 : vector<8x32xf32>
    %112 = arith.mulf %111, %109 : vector<8x32xf32>
    %113 = arith.mulf %104, %3 : vector<8x32xf32>
    %114 = arith.addf %112, %113 : vector<8x32xf32>
    %c0_24 = arith.constant 0 : index
    %c0_25 = arith.constant 0 : index
    %115 = vector.load %arg10[%c0_24, %c0_25] : memref<8x32xf32, #tpu.memory_space<vmem>>, vector<8x32xf32>
    tpu.vector_store %arg10[%c0_24, %c0_25], %114 {strides = array<i32>} : memref<8x32xf32, #tpu.memory_space<vmem>>, vector<8x32xf32>,
    %116 = tpu.concatenate %114, %56 in 1 : vector<8x32xf32>, vector<8x1xf32> -> vector<8x33xf32>
    %c0_26 = arith.constant 0 : index
    %c0_27 = arith.constant 0 : index
    %117 = vector.load %arg5[%c0_26, %c0_27] : memref<33x64xf32, #tpu.memory_space<vmem>>, vector<33x64xf32>
    %cst_28 = arith.constant dense<0.000000e+00> : vector<8x64xf32>
    %118 = tpu.matmul %116, %117, %cst_28 {dimension_numbers = #tpu.dot_dimension_numbers<[1], [0], [0], [1], [0, 0, 1, 1], [], []>} : vector<8x33xf32>, vector<33x64xf32>, vector<8x64xf32> -> vector<8x64xf32>
    %cst_29 = arith.constant dense<0xFF800000> : vector<8xf32>
    %119 = vector.multi_reduction <maximumf>, %118, %cst_29 [1] : vector<8x64xf32> to vector<8xf32>
    %120 = vector.shape_cast %119 : vector<8xf32> to vector<8x1xf32>
    %121 = vector.broadcast %120 : vector<8x1xf32> to vector<8x64xf32>
    %122 = arith.subf %118, %121 : vector<8x64xf32>
    %123 = math.exp %122 : vector<8x64xf32>
    %cst_30 = arith.constant dense<0.000000e+00> : vector<8xf32>
    %124 = vector.multi_reduction <add>, %123, %cst_30 [1] : vector<8x64xf32> to vector<8xf32>
    %125 = vector.shape_cast %124 : vector<8xf32> to vector<8x1xf32>
    %126 = math.log %125 : vector<8x1xf32>
    %127 = arith.addf %120, %126 : vector<8x1xf32>
    %128 = vector.broadcast %127 : vector<8x1xf32> to vector<8x64xf32>
    %129 = arith.subf %118, %128 : vector<8x64xf32>
    %cst_31 = arith.constant 0.000000e+00 : f32
    %130 = vector.broadcast %cst_31 : f32 to vector<8x22xf32>
    %131 = tpu.concatenate %129, %114, %70, %130 in 1 : vector<8x64xf32>, vector<8x32xf32>, vector<8x10xf32>, vector<8x22xf32> -> vector<8x128xf32>
    %132 = vector.shape_cast %131 : vector<8x128xf32> to vector<1x8x128xf32>
    %c0_32 = arith.constant 0 : index
    %c0_33 = arith.constant 0 : index
    %c0_34 = arith.constant 0 : index
    %133 = vector.load %arg9[%c0_32, %c0_33, %c0_34] : memref<1x8x128xf32, #tpu.memory_space<vmem>>, vector<1x8x128xf32>
    tpu.vector_store %arg9[%c0_32, %c0_33, %c0_34], %132 {strides = array<i32>} : memref<1x8x128xf32, #tpu.memory_space<vmem>>, vector<1x8x128xf32>,
    return
  }
  func.func @transform_0(%arg0: i32, %arg1: memref<6x8xi32, #tpu.memory_space<smem>>) -> (i32, i32) {
    %c0_i32 = arith.constant 0 : i32
    %c0_i32_0 = arith.constant 0 : i32
    %c0_i32_1 = arith.constant 0 : i32
    return %c0_i32, %c0_i32_0 : i32, i32
  }
  func.func @transform_1(%arg0: i32, %arg1: memref<6x8xi32, #tpu.memory_space<smem>>) -> (i32, i32) {
    %c0_i32 = arith.constant 0 : i32
    %c0_i32_0 = arith.constant 0 : i32
    %c0_i32_1 = arith.constant 0 : i32
    return %c0_i32, %c0_i32_0 : i32, i32
  }
  func.func @transform_2(%arg0: i32, %arg1: memref<6x8xi32, #tpu.memory_space<smem>>) -> (i32, i32) {
    %c0_i32 = arith.constant 0 : i32
    %c0_i32_0 = arith.constant 0 : i32
    %c0_i32_1 = arith.constant 0 : i32
    return %c0_i32, %c0_i32_0 : i32, i32
  }
  func.func @transform_3(%arg0: i32, %arg1: memref<6x8xi32, #tpu.memory_space<smem>>) -> (i32, i32) {
    %c0_i32 = arith.constant 0 : i32
    %c0_i32_0 = arith.constant 0 : i32
    %c0_i32_1 = arith.constant 0 : i32
    return %c0_i32, %c0_i32_0 : i32, i32
  }
  func.func @transform_4(%arg0: i32, %arg1: memref<6x8xi32, #tpu.memory_space<smem>>) -> (i32, i32) {
    %c0_i32 = arith.constant 0 : i32
    %c0_i32_0 = arith.constant 0 : i32
    %c0_i32_1 = arith.constant 0 : i32
    return %c0_i32, %c0_i32_0 : i32, i32
  }
  func.func @transform_5(%arg0: i32, %arg1: memref<6x8xi32, #tpu.memory_space<smem>>) -> (i32, i32) {
    %c0_i32 = arith.constant 0 : i32
    %c0_i32_0 = arith.constant 0 : i32
    %c0_i32_1 = arith.constant 0 : i32
    return %c0_i32, %c0_i32_0 : i32, i32
  }
  func.func @transform_6(%arg0: i32, %arg1: memref<6x8xi32, #tpu.memory_space<smem>>) -> (i32, i32) {
    %c0_i32 = arith.constant 0 : i32
    %c0_i32_0 = arith.constant 0 : i32
    %c0_i32_1 = arith.constant 0 : i32
    return %c0_i32, %c0_i32_0 : i32, i32
  }
  func.func @transform_7(%arg0: i32, %arg1: memref<6x8xi32, #tpu.memory_space<smem>>) -> (i32, i32, i32) {
    %c0_i32 = arith.constant 0 : i32
    %c0_i32_0 = arith.constant 0 : i32
    %c0_i32_1 = arith.constant 0 : i32
    return %arg0, %c0_i32, %c0_i32_0 : i32, i32, i32
  }
}

</mosaic_0001>

<llo_original>
// kernel: attn_decoder_forward.1
$region0: #{attn_decoder_forward.1}
  #allocation0 [shape = 'u32[]', space=smem, size = 0x4, offset = 0x4, fixed_abs, tag = 'smem constant byte address 0x4 - core index']
  #allocation1 [shape = 'u32[144,128]{1,0:T(1,128)}', space=vmem, size = 0x12000, scoped, tag = 'internal scratch']
  #allocation2 [shape = 'f32[8,32]{1,0:T(8,128)}', space=vmem, size = 0x1000, scoped, tag = 'scratch operand']
  #allocation3 [shape = 'f32[80,32]{1,0:T(8,128)}', space=vmem, size = 0xa000, scoped, tag = 'scratch operand']
  #allocation4 [shape = 's32[1]{0}', space=sflag, size = 0x4, scoped, tag = 'scoped memory for attn_decoder_forward.1']
  #allocation5 [shape = 'u8[4096]{0}', space=smem, size = 0x1000, scoped, tag = 'prefetched SMEM operand 0']
  %s0 = inlined_call_operand.vmem [shape: s32[6,8], index: 0, kind: input, shape index: {}]
  %s1 = inlined_call_operand.vmem [shape: f32[64,32], index: 1, kind: input, shape index: {}]
  %s2 = inlined_call_operand.vmem [shape: f32[65,160], index: 2, kind: input, shape index: {}]
  %s3 = inlined_call_operand.vmem [shape: f32[65,128], index: 3, kind: input, shape index: {}]
  %s4 = inlined_call_operand.vmem [shape: f32[33,64], index: 4, kind: input, shape index: {}]
  %s5 = inlined_call_operand.vmem [shape: f32[32,32], index: 5, kind: input, shape index: {}]
  %s6 = inlined_call_operand.vmem [shape: f32[80,32], index: 6, kind: input, shape index: {}]
  %s7 = inlined_call_operand.vmem [shape: f32[8,32], index: 7, kind: input, shape index: {}]
  %s8 = inlined_call_operand.vmem [shape: f32[6,8,128], index: 8, kind: output, shape index: {}]
  %s9 = sld [smem:[#allocation0]]
  $region65: #{attn_decoder_forward.1} parent=0
    _
  %s11 = ssub.s32 1, %s9
  %s12 = scalar_select 0, %s11, %s9
  %s13 = sshll.u32 %s0, 4
  %s14 = int_to_ptr.vmem [resolvable:$true] %s13
  %16 = dma.vmem_to_smem %s14, 128, [#allocation5], [#allocation4]
  %17 = dma.done [#allocation4], 128
  %18 = sfence
  loop: start=0, step=1, limit=8
  $region2: #{attn_decoder_forward.1} parent=0 // loop_pre_header
    _
  $region3: #{attn_decoder_forward.1} parent=0 // loop_header
    %s20 = sphi 0, %s24
    %p21 = scmp.ge.s32.totalorder %s20, 8
    %s28 = sphi 0, %s28
    %s30 = sphi 0, %s28
    %s31 = sphi 0, %s30
    %s45 = sphi 0, %s31
    %s49 = sphi 0, %s49
    %s51 = sphi 0, %s49
    %s52 = sphi 0, %s51
    %s66 = sphi 0, %s52
    %s70 = sphi 0, %s70
    %s72 = sphi 0, %s70
    %s73 = sphi 0, %s72
    %s87 = sphi 0, %s73
    %s91 = sphi 0, %s91
    %s93 = sphi 0, %s91
    %s94 = sphi 0, %s93
    %s108 = sphi 0, %s94
    %s112 = sphi 0, %s112
    %s114 = sphi 0, %s112
    %s115 = sphi 0, %s114
    %s129 = sphi 0, %s115
    %s133 = sphi 0, %s133
    %s135 = sphi 0, %s133
    %s136 = sphi 0, %s135
    %s150 = sphi 0, %s136
    %s154 = sphi 0, %s154
    %s156 = sphi 0, %s154
    %s157 = sphi 0, %s156
    %s171 = sphi 0, %s157
    %s177 = sphi 0, %s179
    %s180 = sphi 0, %s177
    %s181 = sphi 0, %s180
    %s197 = sphi 0, %s181
  $region4: #{attn_decoder_forward.1} parent=0 // loop_header_branch
    %23 = sbr.rel (%p21) target = $region8
  $region5: #{attn_decoder_forward.1} parent=0 // loop_body
    %s25 = ssub.s32 %s20, 1
    %s26 = ssub.s32 %s20, 2
    %s27 = sadd.s32 %s20, 1
    %s29 = sadd.s32 %s28, 1
    %p32 = scmp.eq.s32.totalorder %s20, 5
    %p33 = scmp.ne.s32.totalorder %s28, %s30
    %p34 = scmp.eq.s32.totalorder %s20, 0
    %p35 = por %p33, %p34
    %p36 = scmp.ne.s32.totalorder %s28, %s30
    %p37 = scmp.eq.s32.totalorder %s25, 5
    %p38 = por %p36, %p37
    %p39 = scmp.ne.s32.totalorder %s30, %s31
    %p40 = scmp.eq.s32.totalorder %s25, 0
    %p41 = por %p39, %p40
    %p42 = scmp.ne.s32.totalorder %s30, %s31
    %p43 = scmp.eq.s32.totalorder %s26, 5
    %p44 = por %p42, %p43
    %p46 = scmp.ne.s32.totalorder %s31, %s45
    %p47 = scmp.eq.s32.totalorder %s26, 0
    %p48 = por %p46, %p47
    %s50 = sadd.s32 %s49, 1
    %p53 = scmp.eq.s32.totalorder %s20, 5
    %p54 = scmp.ne.s32.totalorder %s49, %s51
    %p55 = scmp.eq.s32.totalorder %s20, 0
    %p56 = por %p54, %p55
    %p57 = scmp.ne.s32.totalorder %s49, %s51
    %p58 = scmp.eq.s32.totalorder %s25, 5
    %p59 = por %p57, %p58
    %p60 = scmp.ne.s32.totalorder %s51, %s52
    %p61 = scmp.eq.s32.totalorder %s25, 0
    %p62 = por %p60, %p61
    %p63 = scmp.ne.s32.totalorder %s51, %s52
    %p64 = scmp.eq.s32.totalorder %s26, 5
    %p65 = por %p63, %p64
    %p67 = scmp.ne.s32.totalorder %s52, %s66
    %p68 = scmp.eq.s32.totalorder %s26, 0
    %p69 = por %p67, %p68
    %s71 = sadd.s32 %s70, 1
    %p74 = scmp.eq.s32.totalorder %s20, 5
    %p75 = scmp.ne.s32.totalorder %s70, %s72
    %p76 = scmp.eq.s32.totalorder %s20, 0
    %p77 = por %p75, %p76
    %p78 = scmp.ne.s32.totalorder %s70, %s72
    %p79 = scmp.eq.s32.totalorder %s25, 5
    %p80 = por %p78, %p79
    %p81 = scmp.ne.s32.totalorder %s72, %s73
    %p82 = scmp.eq.s32.totalorder %s25, 0
    %p83 = por %p81, %p82
    %p84 = scmp.ne.s32.totalorder %s72, %s73
    %p85 = scmp.eq.s32.totalorder %s26, 5
    %p86 = por %p84, %p85
    %p88 = scmp.ne.s32.totalorder %s73, %s87
    %p89 = scmp.eq.s32.totalorder %s26, 0
    %p90 = por %p88, %p89
    %s92 = sadd.s32 %s91, 1
    %p95 = scmp.eq.s32.totalorder %s20, 5
    %p96 = scmp.ne.s32.totalorder %s91, %s93
    %p97 = scmp.eq.s32.totalorder %s20, 0
    %p98 = por %p96, %p97
    %p99 = scmp.ne.s32.totalorder %s91, %s93
    %p100 = scmp.eq.s32.totalorder %s25, 5
    %p101 = por %p99, %p100
    %p102 = scmp.ne.s32.totalorder %s93, %s94
    %p103 = scmp.eq.s32.totalorder %s25, 0
    %p104 = por %p102, %p103
    %p105 = scmp.ne.s32.totalorder %s93, %s94
    %p106 = scmp.eq.s32.totalorder %s26, 5
    %p107 = por %p105, %p106
    %p109 = scmp.ne.s32.totalorder %s94, %s108
    %p110 = scmp.eq.s32.totalorder %s26, 0
    %p111 = por %p109, %p110
    %s113 = sadd.s32 %s112, 1
    %p116 = scmp.eq.s32.totalorder %s20, 5
    %p117 = scmp.ne.s32.totalorder %s112, %s114
    %p118 = scmp.eq.s32.totalorder %s20, 0
    %p119 = por %p117, %p118
    %p120 = scmp.ne.s32.totalorder %s112, %s114
    %p121 = scmp.eq.s32.totalorder %s25, 5
    %p122 = por %p120, %p121
    %p123 = scmp.ne.s32.totalorder %s114, %s115
    %p124 = scmp.eq.s32.totalorder %s25, 0
    %p125 = por %p123, %p124
    %p126 = scmp.ne.s32.totalorder %s114, %s115
    %p127 = scmp.eq.s32.totalorder %s26, 5
    %p128 = por %p126, %p127
    %p130 = scmp.ne.s32.totalorder %s115, %s129
    %p131 = scmp.eq.s32.totalorder %s26, 0
    %p132 = por %p130, %p131
    %s134 = sadd.s32 %s133, 1
    %p137 = scmp.eq.s32.totalorder %s20, 5
    %p138 = scmp.ne.s32.totalorder %s133, %s135
    %p139 = scmp.eq.s32.totalorder %s20, 0
    %p140 = por %p138, %p139
    %p141 = scmp.ne.s32.totalorder %s133, %s135
    %p142 = scmp.eq.s32.totalorder %s25, 5
    %p143 = por %p141, %p142
    %p144 = scmp.ne.s32.totalorder %s135, %s136
    %p145 = scmp.eq.s32.totalorder %s25, 0
    %p146 = por %p144, %p145
    %p147 = scmp.ne.s32.totalorder %s135, %s136
    %p148 = scmp.eq.s32.totalorder %s26, 5
    %p149 = por %p147, %p148
    %p151 = scmp.ne.s32.totalorder %s136, %s150
    %p152 = scmp.eq.s32.totalorder %s26, 0
    %p153 = por %p151, %p152
    %s155 = sadd.s32 %s154, 1
    %p158 = scmp.eq.s32.totalorder %s20, 5
    %p159 = scmp.ne.s32.totalorder %s154, %s156
    %p160 = scmp.eq.s32.totalorder %s20, 0
    %p161 = por %p159, %p160
    %p162 = scmp.ne.s32.totalorder %s154, %s156
    %p163 = scmp.eq.s32.totalorder %s25, 5
    %p164 = por %p162, %p163
    %p165 = scmp.ne.s32.totalorder %s156, %s157
    %p166 = scmp.eq.s32.totalorder %s25, 0
    %p167 = por %p165, %p166
    %p168 = scmp.ne.s32.totalorder %s156, %s157
    %p169 = scmp.eq.s32.totalorder %s26, 5
    %p170 = por %p168, %p169
    %p172 = scmp.ne.s32.totalorder %s157, %s171
    %p173 = scmp.eq.s32.totalorder %s26, 0
    %p174 = por %p172, %p173
    %s175 = ssub.s32 %s20, %s27
    %p176 = scmp.eq.s32.totalorder %s175, 0
    %s178 = sadd.s32 %s177, 1
    %s179 = scalar_select %p176, %s177, %s178
    %p182 = pneg %p176
    %p183 = scmp.eq.s32.totalorder %s20, 5
    %p184 = por %p182, %p183
    %p185 = scmp.ne.s32.totalorder %s177, %s180
    %p186 = scmp.eq.s32.totalorder %s20, 0
    %p187 = por %p185, %p186
    %p188 = scmp.ne.s32.totalorder %s177, %s180
    %p189 = scmp.eq.s32.totalorder %s25, 5
    %p190 = por %p188, %p189
    %p191 = scmp.ne.s32.totalorder %s180, %s181
    %p192 = scmp.eq.s32.totalorder %s25, 0
    %p193 = por %p191, %p192
    %p194 = scmp.ne.s32.totalorder %s180, %s181
    %p195 = scmp.eq.s32.totalorder %s26, 5
    %p196 = por %p194, %p195
    %p198 = scmp.ne.s32.totalorder %s181, %s197
    %p199 = scmp.eq.s32.totalorder %s26, 0
    %p200 = por %p198, %p199
    %p201 = scmp.le.s32.totalorder 1, %s20
    %p202 = scmp.lt.s32.totalorder %s20, 7
    %p203 = pnand %p201, %p202
    %p204 = pneg %p203
    // Predicated region
    $region9: #{attn_decoder_forward.1} parent=5 // pred_check
      _
    $region10: #{attn_decoder_forward.1} parent=5 // pred_check_branch
      %206 = sbr.rel (%p203) target = $region12
    $region11: #{attn_decoder_forward.1} parent=5 // pred_region
      %s207 = ssub.s32 %s20, 1
      // Predicated region
      $region13: #{attn_decoder_forward.1} parent=11 // pred_check
        %p208 = pneg %p41
      $region14: #{attn_decoder_forward.1} parent=11 // pred_check_branch
        %210 = sbr.rel (%p208) target = $region16
      $region15: #{attn_decoder_forward.1} parent=11 // pred_region
        _
      $region16: #{attn_decoder_forward.1} parent=11 // pred_fallthru
        _
      // Predicated region
      $region17: #{attn_decoder_forward.1} parent=11 // pred_check
        %p211 = pneg %p62
      $region18: #{attn_decoder_forward.1} parent=11 // pred_check_branch
        %213 = sbr.rel (%p211) target = $region20
      $region19: #{attn_decoder_forward.1} parent=11 // pred_region
        _
      $region20: #{attn_decoder_forward.1} parent=11 // pred_fallthru
        _
      // Predicated region
      $region21: #{attn_decoder_forward.1} parent=11 // pred_check
        %p214 = pneg %p83
      $region22: #{attn_decoder_forward.1} parent=11 // pred_check_branch
        %216 = sbr.rel (%p214) target = $region24
      $region23: #{attn_decoder_forward.1} parent=11 // pred_region
        _
      $region24: #{attn_decoder_forward.1} parent=11 // pred_fallthru
        _
      // Predicated region
      $region25: #{attn_decoder_forward.1} parent=11 // pred_check
        %p217 = pneg %p104
      $region26: #{attn_decoder_forward.1} parent=11 // pred_check_branch
        %219 = sbr.rel (%p217) target = $region28
      $region27: #{attn_decoder_forward.1} parent=11 // pred_region
        _
      $region28: #{attn_decoder_forward.1} parent=11 // pred_fallthru
        _
      // Predicated region
      $region29: #{attn_decoder_forward.1} parent=11 // pred_check
        %p220 = pneg %p125
      $region30: #{attn_decoder_forward.1} parent=11 // pred_check_branch
        %222 = sbr.rel (%p220) target = $region32
      $region31: #{attn_decoder_forward.1} parent=11 // pred_region
        _
      $region32: #{attn_decoder_forward.1} parent=11 // pred_fallthru
        _
      // Predicated region
      $region33: #{attn_decoder_forward.1} parent=11 // pred_check
        %p223 = pneg %p146
      $region34: #{attn_decoder_forward.1} parent=11 // pred_check_branch
        %225 = sbr.rel (%p223) target = $region36
      $region35: #{attn_decoder_forward.1} parent=11 // pred_region
        _
      $region36: #{attn_decoder_forward.1} parent=11 // pred_fallthru
        _
      // Predicated region
      $region37: #{attn_decoder_forward.1} parent=11 // pred_check
        %p226 = pneg %p167
      $region38: #{attn_decoder_forward.1} parent=11 // pred_check_branch
        %228 = sbr.rel (%p226) target = $region40
      $region39: #{attn_decoder_forward.1} parent=11 // pred_region
        _
      $region40: #{attn_decoder_forward.1} parent=11 // pred_fallthru
        _
    $region12: #{attn_decoder_forward.1} parent=5 // pred_fallthru
      _
    %p229 = scmp.lt.s32.totalorder %s20, 6
    // Predicated region
    $region41: #{attn_decoder_forward.1} parent=5 // pred_check
      %p230 = pneg %p229
    $region42: #{attn_decoder_forward.1} parent=5 // pred_check_branch
      %232 = sbr.rel (%p230) target = $region44
    $region43: #{attn_decoder_forward.1} parent=5 // pred_region
      _
    $region44: #{attn_decoder_forward.1} parent=5 // pred_fallthru
      _
    %p233 = scmp.le.s32.totalorder 1, %s20
    %p234 = scmp.lt.s32.totalorder %s20, 7
    %p235 = pnand %p233, %p234
    %p236 = pneg %p235
    // Predicated region
    $region45: #{attn_decoder_forward.1} parent=5 // pred_check
      _
    $region46: #{attn_decoder_forward.1} parent=5 // pred_check_branch
      %238 = sbr.rel (%p235) target = $region48
    $region47: #{attn_decoder_forward.1} parent=5 // pred_region
      %s239 = ssub.s32 %s20, 1
      %p240 = pneg %p41
      %p241 = pneg %p38
      %p242 = pneg %p62
      %p243 = pneg %p59
      %p244 = pneg %p83
      %p245 = pneg %p80
      %p246 = pneg %p104
      %p247 = pneg %p101
      %p248 = pneg %p125
      %p249 = pneg %p122
      %p250 = pneg %p146
      %p251 = pneg %p143
      %p252 = pneg %p167
      %p253 = pneg %p164
      %p254 = pneg %p193
      %p255 = pneg %p190
      %p256 = scmp.lt.s32.totalorder %s25, 5
      %s257 = scalar_select %p256, %s25, 5
      %s258 = smul.addr %s257, 8
      %s259 = scalar_lea.vmem %s8, %s258
      %p260 = scmp.lt.s32.totalorder %s25, 5
      %s261 = scalar_select %p260, %s25, 5
      %s262 = smul.addr %s261, 8
      %s263 = scalar_lea.vmem %s8, %s262
      %p264 = scmp.eq.s32.totalorder %s25, 0
      // Predicated region
      $region49: #{attn_decoder_forward.1} parent=47 // pred_check
        %p265 = pneg %p264
      $region50: #{attn_decoder_forward.1} parent=47 // pred_check_branch
        %267 = sbr.rel (%p265) target = $region52
      $region51: #{attn_decoder_forward.1} parent=47 // pred_region
        %v268 = vld [vmem:[%s7] sm:$0xff]
        %vm269 = vcmask 261120
        %270 = vst.msk [vmem:[#allocation2] sm:$0xff] %vm269, %v268
        %v271 = vld [vmem:[%s6] sm:$0xff]
        %v272 = vld [vmem:[%s6 + $0x8] sm:$0xff]
        %v273 = vld [vmem:[%s6 + $0x10] sm:$0xff]
        %v274 = vld [vmem:[%s6 + $0x18] sm:$0xff]
        %v275 = vld [vmem:[%s6 + $0x20] sm:$0xff]
        %v276 = vld [vmem:[%s6 + $0x28] sm:$0xff]
        %v277 = vld [vmem:[%s6 + $0x30] sm:$0xff]
        %v278 = vld [vmem:[%s6 + $0x38] sm:$0xff]
        %v279 = vld [vmem:[%s6 + $0x40] sm:$0xff]
        %v280 = vld [vmem:[%s6 + $0x48] sm:$0xff]
        %v281 = vld [vmem:[%s5] sm:$0xff]
        %v282 = vld [vmem:[%s5 + $0x8] sm:$0xff]
        %v283 = vld [vmem:[%s5 + $0x10] sm:$0xff]
        %v284 = vld [vmem:[%s5 + $0x18] sm:$0xff]
        %v286 = vsel %vm269, %v271, 0
        %v289 = vsel %vm269, %v272, 0
        %v292 = vsel %vm269, %v273, 0
        %v295 = vsel %vm269, %v274, 0
        %v298 = vsel %vm269, %v275, 0
        %v301 = vsel %vm269, %v276, 0
        %v304 = vsel %vm269, %v277, 0
        %v307 = vsel %vm269, %v278, 0
        %v310 = vsel %vm269, %v279, 0
        %v313 = vsel %vm269, %v280, 0
        %315 = vmatprep.subr.mxu0 0.0
        %316 = vmatpush1.msra.mxu0 0.0
        %317 = vmatprep.subr.mxu0 0.0
        %318 = vmatpush1.msra.mxu0 0.0
        %319 = vmatprep.subr.mxu0 0.0
        %320 = vmatpush1.msra.mxu0 0.0
        %321 = vmatprep.subr.mxu0 0.0
        %322 = vmatpush1.msra.mxu0 0.0
        %323 = vmatprep.subr.mxu0 0.0
        %324 = vmatpush1.msra.mxu0 0.0
        %325 = vmatprep.subr.mxu0 0.0
        %326 = vmatpush1.msra.mxu0 0.0
        %327 = vmatprep.subr.mxu0 0.0
        %328 = vmatpush1.msra.mxu0 0.0
        %329 = vmatprep.subr.mxu0 0.0
        %330 = vmatpush1.msra.mxu0 0.0
        %331 = vmatprep.subr.mxu0 0.0
        %332 = vmatpush1.msra.mxu0 0.0
        %333 = vmatprep.subr.mxu0 0.0
        %334 = vmatpush1.msra.mxu0 0.0
        %335 = vmatprep.subr.mxu0 0.0
        %336 = vmatpush1.msra.mxu0 0.0
        %337 = vmatprep.subr.mxu0 0.0
        %338 = vmatpush1.msra.mxu0 0.0
        %339 = vmatprep.subr.mxu0 0.0
        %340 = vmatpush1.msra.mxu0 %v284
        %341 = vmatprep.subr.mxu0 0.0
        %342 = vmatpush1.msra.mxu0 %v283
        %343 = vmatprep.subr.mxu0 0.0
        %344 = vmatpush1.msra.mxu0 %v282
        %345 = vmatprep.subr.mxu0 0.0
        %346 = vmatpush1.msra.mxu0 %v281
        %347 = vmatprep.subr.mxu0 0.0
        %348 = vmatpush2.msra.mxu0 0.0
        %349 = vmatprep.subr.mxu0 0.0
        %350 = vmatpush2.msra.mxu0 0.0
        %351 = vmatprep.subr.mxu0 0.0
        %352 = vmatpush2.msra.mxu0 0.0
        %353 = vmatprep.subr.mxu0 0.0
        %354 = vmatpush2.msra.mxu0 0.0
        %355 = vmatprep.subr.mxu0 0.0
        %356 = vmatpush2.msra.mxu0 0.0
        %357 = vmatprep.subr.mxu0 0.0
        %358 = vmatpush2.msra.mxu0 0.0
        %359 = vmatprep.subr.mxu0 0.0
        %360 = vmatpush2.msra.mxu0 0.0
        %361 = vmatprep.subr.mxu0 0.0
        %362 = vmatpush2.msra.mxu0 0.0
        %363 = vmatprep.subr.mxu0 0.0
        %364 = vmatpush2.msra.mxu0 0.0
        %365 = vmatprep.subr.mxu0 0.0
        %366 = vmatpush2.msra.mxu0 0.0
        %367 = vmatprep.subr.mxu0 0.0
        %368 = vmatpush2.msra.mxu0 0.0
        %369 = vmatprep.subr.mxu0 0.0
        %370 = vmatpush2.msra.mxu0 0.0
        %371 = vmatprep.subr.mxu0 0.0
        %372 = vmatpush2.msra.mxu0 0.0
        %373 = vmatprep.subr.mxu0 0.0
        %374 = vmatpush2.msra.mxu0 0.0
        %375 = vmatprep.subr.mxu0 0.0
        %376 = vmatpush2.msra.mxu0 0.0
        %377 = vmatprep.subr.mxu0 0.0
        %378 = vmatpush2.msra.mxu0 0.0
        %379 = vmatprep.mubr.f32.mxu0 0.0
        %380 = vmatmul.mubr.f32.gmra.mxu0 %v286
        %v381 = vpop.f32.mrf.mxu0
        %v382 = vadd.f32 0.0, %v381
        %v383 = vpop.f32.mrf.mxu0
        %384 = vmatprep.mubr.f32.mxu0 0.0
        %385 = vmatmul.mubr.f32.gmra.mxu0 %v289
        %v386 = vpop.f32.mrf.mxu0
        %v387 = vadd.f32 0.0, %v386
        %v388 = vpop.f32.mrf.mxu0
        %389 = vmatprep.mubr.f32.mxu0 0.0
        %390 = vmatmul.mubr.f32.gmra.mxu0 %v292
        %v391 = vpop.f32.mrf.mxu0
        %v392 = vadd.f32 0.0, %v391
        %v393 = vpop.f32.mrf.mxu0
        %394 = vmatprep.mubr.f32.mxu0 0.0
        %395 = vmatmul.mubr.f32.gmra.mxu0 %v295
        %v396 = vpop.f32.mrf.mxu0
        %v397 = vadd.f32 0.0, %v396
        %v398 = vpop.f32.mrf.mxu0
        %399 = vmatprep.mubr.f32.mxu0 0.0
        %400 = vmatmul.mubr.f32.gmra.mxu0 %v298
        %v401 = vpop.f32.mrf.mxu0
        %v402 = vadd.f32 0.0, %v401
        %v403 = vpop.f32.mrf.mxu0
        %404 = vmatprep.mubr.f32.mxu0 0.0
        %405 = vmatmul.mubr.f32.gmra.mxu0 %v301
        %v406 = vpop.f32.mrf.mxu0
        %v407 = vadd.f32 0.0, %v406
        %v408 = vpop.f32.mrf.mxu0
        %409 = vmatprep.mubr.f32.mxu0 0.0
        %410 = vmatmul.mubr.f32.gmra.mxu0 %v304
        %v411 = vpop.f32.mrf.mxu0
        %v412 = vadd.f32 0.0, %v411
        %v413 = vpop.f32.mrf.mxu0
        %414 = vmatprep.mubr.f32.mxu0 0.0
        %415 = vmatmul.mubr.f32.gmra.mxu0 %v307
        %v416 = vpop.f32.mrf.mxu0
        %v417 = vadd.f32 0.0, %v416
        %v418 = vpop.f32.mrf.mxu0
        %419 = vmatprep.mubr.f32.mxu0 0.0
        %420 = vmatmul.mubr.f32.gmra.mxu0 %v310
        %v421 = vpop.f32.mrf.mxu0
        %v422 = vadd.f32 0.0, %v421
        %v423 = vpop.f32.mrf.mxu0
        %424 = vmatprep.mubr.f32.mxu0 0.0
        %425 = vmatmul.mubr.f32.gmra.mxu0 %v313
        %v426 = vpop.f32.mrf.mxu0
        %v427 = vadd.f32 0.0, %v426
        %v428 = vpop.f32.mrf.mxu0
        %429 = vdwg.mxu0
        %430 = vst.msk [vmem:[#allocation3] sm:$0xff] %vm269, %v382
        %431 = vst.msk [vmem:[#allocation3 + $0x8] sm:$0xff] %vm269, %v387
        %432 = vst.msk [vmem:[#allocation3 + $0x10] sm:$0xff] %vm269, %v392
        %433 = vst.msk [vmem:[#allocation3 + $0x18] sm:$0xff] %vm269, %v397
        %434 = vst.msk [vmem:[#allocation3 + $0x20] sm:$0xff] %vm269, %v402
        %435 = vst.msk [vmem:[#allocation3 + $0x28] sm:$0xff] %vm269, %v407
        %436 = vst.msk [vmem:[#allocation3 + $0x30] sm:$0xff] %vm269, %v412
        %437 = vst.msk [vmem:[#allocation3 + $0x38] sm:$0xff] %vm269, %v417
        %438 = vst.msk [vmem:[#allocation3 + $0x40] sm:$0xff] %vm269, %v422
        %439 = vst.msk [vmem:[#allocation3 + $0x48] sm:$0xff] %vm269, %v427
      $region52: #{attn_decoder_forward.1} parent=47 // pred_fallthru
        _
      %v440 = vld [vmem:[#allocation2] sm:$0xff]
      %v441 = vlaneseq
      %v442 = vand.u32 %v441, 127
      %s443 = smul.u32 %s25, 128
      %s444 = sld [smem:[#allocation5 + %s443]]
      %v445 = vstv %s444
      %vm446 = vcmp.eq.s32.totalorder %v442, %v445
      %v447 = vsel %vm446, 1, 0
      %v448 = vcvt.s32.f32 %v447
      %s449 = sadd.s32 %s443, 1
      %s450 = sld [smem:[#allocation5 + %s449]]
      %v451 = vstv %s450
      %vm452 = vcmp.eq.s32.totalorder %v442, %v451
      %v453 = vsel %vm452, 1, 0
      %v454 = vcvt.s32.f32 %v453
      %s455 = sadd.s32 %s443, 2
      %s456 = sld [smem:[#allocation5 + %s455]]
      %v457 = vstv %s456
      %vm458 = vcmp.eq.s32.totalorder %v442, %v457
      %v459 = vsel %vm458, 1, 0
      %v460 = vcvt.s32.f32 %v459
      %s461 = sadd.s32 %s443, 3
      %s462 = sld [smem:[#allocation5 + %s461]]
      %v463 = vstv %s462
      %vm464 = vcmp.eq.s32.totalorder %v442, %v463
      %v465 = vsel %vm464, 1, 0
      %v466 = vcvt.s32.f32 %v465
      %s467 = sadd.s32 %s443, 4
      %s468 = sld [smem:[#allocation5 + %s467]]
      %v469 = vstv %s468
      %vm470 = vcmp.eq.s32.totalorder %v442, %v469
      %v471 = vsel %vm470, 1, 0
      %v472 = vcvt.s32.f32 %v471
      %s473 = sadd.s32 %s443, 5
      %s474 = sld [smem:[#allocation5 + %s473]]
      %v475 = vstv %s474
      %vm476 = vcmp.eq.s32.totalorder %v442, %v475
      %v477 = vsel %vm476, 1, 0
      %v478 = vcvt.s32.f32 %v477
      %s479 = sadd.s32 %s443, 6
      %s480 = sld [smem:[#allocation5 + %s479]]
      %v481 = vstv %s480
      %vm482 = vcmp.eq.s32.totalorder %v442, %v481
      %v483 = vsel %vm482, 1, 0
      %v484 = vcvt.s32.f32 %v483
      %s485 = sadd.s32 %s443, 7
      %s486 = sld [smem:[#allocation5 + %s485]]
      %v487 = vstv %s486
      %vm488 = vcmp.eq.s32.totalorder %v442, %v487
      %v489 = vsel %vm488, 1, 0
      %v490 = vcvt.s32.f32 %v489
      %vm491 = vcmask 1040384
      %v492 = vsel %vm491, %v448, %v454
      %vm493 = vcmask 1041408
      %v494 = vsel %vm493, %v492, %v460
      %vm495 = vcmask 1042432
      %v496 = vsel %vm495, %v494, %v466
      %vm497 = vcmask 1043456
      %v498 = vsel %vm497, %v496, %v472
      %vm499 = vcmask 1044480
      %v500 = vsel %vm499, %v498, %v478
      %vm501 = vcmask 1045504
      %v502 = vsel %vm501, %v500, %v484
      %vm503 = vcmask 1046528
      %v504 = vsel %vm503, %v502, %v490
      %v505 = vld [vmem:[%s1] sm:$0xff]
      %v506 = vld [vmem:[%s1 + $0x8] sm:$0xff]
      %v507 = vld [vmem:[%s1 + $0x10] sm:$0xff]
      %v508 = vld [vmem:[%s1 + $0x18] sm:$0xff]
      %v509 = vld [vmem:[%s1 + $0x20] sm:$0xff]
      %v510 = vld [vmem:[%s1 + $0x28] sm:$0xff]
      %v511 = vld [vmem:[%s1 + $0x30] sm:$0xff]
      %v512 = vld [vmem:[%s1 + $0x38] sm:$0xff]
      %vm513 = vcmask 523264
      %v515 = vsel %vm513, %v504, 0
      %517 = vmatprep.subr.mxu0 0.0
      %518 = vmatpush1.msra.mxu0 0.0
      %519 = vmatprep.subr.mxu0 0.0
      %520 = vmatpush1.msra.mxu0 0.0
      %521 = vmatprep.subr.mxu0 0.0
      %522 = vmatpush1.msra.mxu0 0.0
      %523 = vmatprep.subr.mxu0 0.0
      %524 = vmatpush1.msra.mxu0 0.0
      %525 = vmatprep.subr.mxu0 0.0
      %526 = vmatpush1.msra.mxu0 0.0
      %527 = vmatprep.subr.mxu0 0.0
      %528 = vmatpush1.msra.mxu0 0.0
      %529 = vmatprep.subr.mxu0 0.0
      %530 = vmatpush1.msra.mxu0 0.0
      %531 = vmatprep.subr.mxu0 0.0
      %532 = vmatpush1.msra.mxu0 0.0
      %533 = vmatprep.subr.mxu0 0.0
      %534 = vmatpush1.msra.mxu0 %v512
      %535 = vmatprep.subr.mxu0 0.0
      %536 = vmatpush1.msra.mxu0 %v511
      %537 = vmatprep.subr.mxu0 0.0
      %538 = vmatpush1.msra.mxu0 %v510
      %539 = vmatprep.subr.mxu0 0.0
      %540 = vmatpush1.msra.mxu0 %v509
      %541 = vmatprep.subr.mxu0 0.0
      %542 = vmatpush1.msra.mxu0 %v508
      %543 = vmatprep.subr.mxu0 0.0
      %544 = vmatpush1.msra.mxu0 %v507
      %545 = vmatprep.subr.mxu0 0.0
      %546 = vmatpush1.msra.mxu0 %v506
      %547 = vmatprep.subr.mxu0 0.0
      %548 = vmatpush1.msra.mxu0 %v505
      %549 = vmatprep.subr.mxu0 0.0
      %550 = vmatpush2.msra.mxu0 0.0
      %551 = vmatprep.subr.mxu0 0.0
      %552 = vmatpush2.msra.mxu0 0.0
      %553 = vmatprep.subr.mxu0 0.0
      %554 = vmatpush2.msra.mxu0 0.0
      %555 = vmatprep.subr.mxu0 0.0
      %556 = vmatpush2.msra.mxu0 0.0
      %557 = vmatprep.subr.mxu0 0.0
      %558 = vmatpush2.msra.mxu0 0.0
      %559 = vmatprep.subr.mxu0 0.0
      %560 = vmatpush2.msra.mxu0 0.0
      %561 = vmatprep.subr.mxu0 0.0
      %562 = vmatpush2.msra.mxu0 0.0
      %563 = vmatprep.subr.mxu0 0.0
      %564 = vmatpush2.msra.mxu0 0.0
      %565 = vmatprep.subr.mxu0 0.0
      %566 = vmatpush2.msra.mxu0 0.0
      %567 = vmatprep.subr.mxu0 0.0
      %568 = vmatpush2.msra.mxu0 0.0
      %569 = vmatprep.subr.mxu0 0.0
      %570 = vmatpush2.msra.mxu0 0.0
      %571 = vmatprep.subr.mxu0 0.0
      %572 = vmatpush2.msra.mxu0 0.0
      %573 = vmatprep.subr.mxu0 0.0
      %574 = vmatpush2.msra.mxu0 0.0
      %575 = vmatprep.subr.mxu0 0.0
      %576 = vmatpush2.msra.mxu0 0.0
      %577 = vmatprep.subr.mxu0 0.0
      %578 = vmatpush2.msra.mxu0 0.0
      %579 = vmatprep.subr.mxu0 0.0
      %580 = vmatpush2.msra.mxu0 0.0
      %581 = vmatprep.mubr.f32.mxu0 0.0
      %582 = vmatmul.mubr.f32.gmra.mxu0 %v515
      %v583 = vpop.f32.mrf.mxu0
      %v584 = vadd.f32 0.0, %v583
      %v585 = vpop.f32.mrf.mxu0
      %586 = vdwg.mxu0
      %588 = vrot.lane.b32.xlu0 %v440, 32
      %v589 = vpop.permute.xlu0 %588
      %vm591 = vcmask 261120
      %v592 = vsel %vm591, %v584, %v589
      %v593 = vsel %vm513, %v592, 1.0
      %v594 = vld [vmem:[%s2] sm:$0xff]
      %v595 = vld [vmem:[%s2 + $0x8] sm:$0xff]
      %v596 = vld [vmem:[%s2 + $0x10] sm:$0xff]
      %v597 = vld [vmem:[%s2 + $0x18] sm:$0xff]
      %v598 = vld [vmem:[%s2 + $0x20] sm:$0xff]
      %v599 = vld [vmem:[%s2 + $0x28] sm:$0xff]
      %v600 = vld [vmem:[%s2 + $0x30] sm:$0xff]
      %v601 = vld [vmem:[%s2 + $0x38] sm:$0xff]
      %v602 = vld [vmem:[%s2 + $0x40] sm:$0xff]
      %v603 = vld [vmem:[%s2 + $0x48] sm:$0xff]
      %v604 = vld [vmem:[%s2 + $0x50] sm:$0xff]
      %v605 = vld [vmem:[%s2 + $0x58] sm:$0xff]
      %v606 = vld [vmem:[%s2 + $0x60] sm:$0xff]
      %v607 = vld [vmem:[%s2 + $0x68] sm:$0xff]
      %v608 = vld [vmem:[%s2 + $0x70] sm:$0xff]
      %v609 = vld [vmem:[%s2 + $0x78] sm:$0xff]
      %v610 = vld [vmem:[%s2 + $0x80] sm:$0x1]
      %v611 = vld [vmem:[%s2 + $0x88] sm:$0x1]
      %vm612 = vcmask 531456
      %v614 = vsel %vm612, %v593, 0
      %v617 = vsel %vm491, %v610, 0
      %v620 = vsel %vm491, %v611, 0
      %622 = vmatprep.subr.mxu0 0.0
      %623 = vmatpush1.msra.mxu0 0.0
      %624 = vmatprep.subr.mxu0 0.0
      %625 = vmatpush1.msra.mxu0 0.0
      %626 = vmatprep.subr.mxu0 0.0
      %627 = vmatpush1.msra.mxu0 0.0
      %628 = vmatprep.subr.mxu0 0.0
      %629 = vmatpush1.msra.mxu0 0.0
      %630 = vmatprep.subr.mxu0 0.0
      %631 = vmatpush1.msra.mxu0 0.0
      %632 = vmatprep.subr.mxu0 0.0
      %633 = vmatpush1.msra.mxu0 0.0
      %634 = vmatprep.subr.mxu0 0.0
      %635 = vmatpush1.msra.mxu0 0.0
      %636 = vmatprep.subr.mxu0 %v620
      %637 = vmatpush1.msra.mxu0 %v617
      %638 = vmatprep.subr.mxu0 %v609
      %639 = vmatpush1.msra.mxu0 %v608
      %640 = vmatprep.subr.mxu0 %v607
      %641 = vmatpush1.msra.mxu0 %v606
      %642 = vmatprep.subr.mxu0 %v605
      %643 = vmatpush1.msra.mxu0 %v604
      %644 = vmatprep.subr.mxu0 %v603
      %645 = vmatpush1.msra.mxu0 %v602
      %646 = vmatprep.subr.mxu0 %v601
      %647 = vmatpush1.msra.mxu0 %v600
      %648 = vmatprep.subr.mxu0 %v599
      %649 = vmatpush1.msra.mxu0 %v598
      %650 = vmatprep.subr.mxu0 %v597
      %651 = vmatpush1.msra.mxu0 %v596
      %652 = vmatprep.subr.mxu0 %v595
      %653 = vmatpush1.msra.mxu0 %v594
      %654 = vmatprep.subr.mxu0 0.0
      %655 = vmatpush2.msra.mxu0 0.0
      %656 = vmatprep.subr.mxu0 0.0
      %657 = vmatpush2.msra.mxu0 0.0
      %658 = vmatprep.subr.mxu0 0.0
      %659 = vmatpush2.msra.mxu0 0.0
      %660 = vmatprep.subr.mxu0 0.0
      %661 = vmatpush2.msra.mxu0 0.0
      %662 = vmatprep.subr.mxu0 0.0
      %663 = vmatpush2.msra.mxu0 0.0
      %664 = vmatprep.subr.mxu0 0.0
      %665 = vmatpush2.msra.mxu0 0.0
      %666 = vmatprep.subr.mxu0 0.0
      %667 = vmatpush2.msra.mxu0 0.0
      %668 = vmatprep.subr.mxu0 0.0
      %669 = vmatpush2.msra.mxu0 0.0
      %670 = vmatprep.subr.mxu0 0.0
      %671 = vmatpush2.msra.mxu0 0.0
      %672 = vmatprep.subr.mxu0 0.0
      %673 = vmatpush2.msra.mxu0 0.0
      %674 = vmatprep.subr.mxu0 0.0
      %675 = vmatpush2.msra.mxu0 0.0
      %676 = vmatprep.subr.mxu0 0.0
      %677 = vmatpush2.msra.mxu0 0.0
      %678 = vmatprep.subr.mxu0 0.0
      %679 = vmatpush2.msra.mxu0 0.0
      %680 = vmatprep.subr.mxu0 0.0
      %681 = vmatpush2.msra.mxu0 0.0
      %682 = vmatprep.subr.mxu0 0.0
      %683 = vmatpush2.msra.mxu0 0.0
      %684 = vmatprep.subr.mxu0 0.0
      %685 = vmatpush2.msra.mxu0 0.0
      %686 = vmatprep.mubr.f32.mxu0 0.0
      %687 = vmatmul.mubr.f32.gmra.mxu0 %v614
      %v688 = vpop.f32.mrf.mxu0
      %v689 = vadd.f32 0.0, %v688
      %v690 = vpop.f32.mrf.mxu0
      %v691 = vadd.f32 0.0, %v690
      %692 = vdwg.mxu0
      %vm693 = vcmask 80896
      %v694 = vsel %vm693, %v689, -inf
      %695 = vmax.xlane.f32.xlu0 %v694
      %v696 = vpop.xlane.xlu0 %695
      %v697 = vsub.f32 %v689, %v696
      %v698 = vmul.f32 %v697, 1.442695
      %v699 = vpow.pop %v698
      %v700 = vsel %vm693, %v699, 0.0
      %701 = vadd.xlane.f32.xlu0 %v700
      %v702 = vpop.xlane.xlu0 %701
      %v703 = vrcp.pop %v702
      %v704 = vmul.f32 %v699, %v703
      %v705 = vlaneseq
      %v706 = vshrl.u32 %v705, 7
      %v707 = vmul.u32 %v706, 10
      %vm708 = vcmp.ge.s32.totalorder %v442, %v707
      %v709 = vadd.s32 %v707, 10
      %vm710 = vcmp.lt.s32.totalorder %v442, %v709
      %vm711 = vmand %vm708, %vm710
      %713 = vrot.lane.b32.xlu0 %v704, 10
      %v714 = vpop.permute.xlu0 %713
      %716 = vrot.lane.b32.xlu0 %v704, 20
      %v717 = vpop.permute.xlu0 %716
      %719 = vrot.lane.b32.xlu0 %v704, 30
      %v720 = vpop.permute.xlu0 %719
      %722 = vrot.lane.b32.xlu0 %v704, 40
      %v723 = vpop.permute.xlu0 %722
      %725 = vrot.lane.b32.xlu0 %v704, 50
      %v726 = vpop.permute.xlu0 %725
      %728 = vrot.lane.b32.xlu0 %v704, 60
      %v729 = vpop.permute.xlu0 %728
      %731 = vrot.lane.b32.xlu0 %v704, 70
      %v732 = vpop.permute.xlu0 %731
      %v734 = vsel %vm693, %v704, %v714
      %vm735 = vcmask 162816
      %v736 = vsel %vm735, %v734, %v717
      %vm737 = vcmask 244736
      %v738 = vsel %vm737, %v736, %v720
      %vm739 = vcmask 326656
      %v740 = vsel %vm739, %v738, %v723
      %vm741 = vcmask 408576
      %v742 = vsel %vm741, %v740, %v726
      %vm743 = vcmask 490496
      %v744 = vsel %vm743, %v742, %v729
      %vm745 = vcmask 572416
      %v746 = vsel %vm745, %v744, %v732
      %v747 = vsel %vm711, %v746, 0.0
      %v748 = vld [vmem:[#allocation3] sm:$0xff]
      %v749 = vld [vmem:[#allocation3 + $0x8] sm:$0xff]
      %v750 = vld [vmem:[#allocation3 + $0x10] sm:$0xff]
      %v751 = vld [vmem:[#allocation3 + $0x18] sm:$0xff]
      %v752 = vld [vmem:[#allocation3 + $0x20] sm:$0xff]
      %v753 = vld [vmem:[#allocation3 + $0x28] sm:$0xff]
      %v754 = vld [vmem:[#allocation3 + $0x30] sm:$0xff]
      %v755 = vld [vmem:[#allocation3 + $0x38] sm:$0xff]
      %v756 = vld [vmem:[#allocation3 + $0x40] sm:$0xff]
      %v757 = vld [vmem:[#allocation3 + $0x48] sm:$0xff]
      %vm758 = vcmask 654336
      %v760 = vsel %vm758, %v747, 0
      %762 = vmatprep.subr.mxu0 0.0
      %763 = vmatpush1.msra.mxu0 0.0
      %764 = vmatprep.subr.mxu0 0.0
      %765 = vmatpush1.msra.mxu0 0.0
      %766 = vmatprep.subr.mxu0 0.0
      %767 = vmatpush1.msra.mxu0 0.0
      %768 = vmatprep.subr.mxu0 0.0
      %769 = vmatpush1.msra.mxu0 0.0
      %770 = vmatprep.subr.mxu0 0.0
      %771 = vmatpush1.msra.mxu0 0.0
      %772 = vmatprep.subr.mxu0 0.0
      %773 = vmatpush1.msra.mxu0 0.0
      %774 = vmatprep.subr.mxu0 0.0
      %775 = vmatpush1.msra.mxu0 %v757
      %776 = vmatprep.subr.mxu0 0.0
      %777 = vmatpush1.msra.mxu0 %v756
      %778 = vmatprep.subr.mxu0 0.0
      %779 = vmatpush1.msra.mxu0 %v755
      %780 = vmatprep.subr.mxu0 0.0
      %781 = vmatpush1.msra.mxu0 %v754
      %782 = vmatprep.subr.mxu0 0.0
      %783 = vmatpush1.msra.mxu0 %v753
      %784 = vmatprep.subr.mxu0 0.0
      %785 = vmatpush1.msra.mxu0 %v752
      %786 = vmatprep.subr.mxu0 0.0
      %787 = vmatpush1.msra.mxu0 %v751
      %788 = vmatprep.subr.mxu0 0.0
      %789 = vmatpush1.msra.mxu0 %v750
      %790 = vmatprep.subr.mxu0 0.0
      %791 = vmatpush1.msra.mxu0 %v749
      %792 = vmatprep.subr.mxu0 0.0
      %793 = vmatpush1.msra.mxu0 %v748
      %794 = vmatprep.subr.mxu0 0.0
      %795 = vmatpush2.msra.mxu0 0.0
      %796 = vmatprep.subr.mxu0 0.0
      %797 = vmatpush2.msra.mxu0 0.0
      %798 = vmatprep.subr.mxu0 0.0
      %799 = vmatpush2.msra.mxu0 0.0
      %800 = vmatprep.subr.mxu0 0.0
      %801 = vmatpush2.msra.mxu0 0.0
      %802 = vmatprep.subr.mxu0 0.0
      %803 = vmatpush2.msra.mxu0 0.0
      %804 = vmatprep.subr.mxu0 0.0
      %805 = vmatpush2.msra.mxu0 0.0
      %806 = vmatprep.subr.mxu0 0.0
      %807 = vmatpush2.msra.mxu0 0.0
      %808 = vmatprep.subr.mxu0 0.0
      %809 = vmatpush2.msra.mxu0 0.0
      %810 = vmatprep.subr.mxu0 0.0
      %811 = vmatpush2.msra.mxu0 0.0
      %812 = vmatprep.subr.mxu0 0.0
      %813 = vmatpush2.msra.mxu0 0.0
      %814 = vmatprep.subr.mxu0 0.0
      %815 = vmatpush2.msra.mxu0 0.0
      %816 = vmatprep.subr.mxu0 0.0
      %817 = vmatpush2.msra.mxu0 0.0
      %818 = vmatprep.subr.mxu0 0.0
      %819 = vmatpush2.msra.mxu0 0.0
      %820 = vmatprep.subr.mxu0 0.0
      %821 = vmatpush2.msra.mxu0 0.0
      %822 = vmatprep.subr.mxu0 0.0
      %823 = vmatpush2.msra.mxu0 0.0
      %824 = vmatprep.subr.mxu0 0.0
      %825 = vmatpush2.msra.mxu0 0.0
      %826 = vmatprep.mubr.f32.mxu0 0.0
      %827 = vmatmul.mubr.f32.gmra.mxu0 %v760
      %v828 = vpop.f32.mrf.mxu0
      %v829 = vadd.f32 0.0, %v828
      %v830 = vpop.f32.mrf.mxu0
      %831 = vdwg.mxu0
      %v832 = vadd.f32 %v691, %v829
      %v833 = vmax.f32 %v832, 0.0
      %v834 = vsel %vm591, %v833, %v589
      %v835 = vsel %vm513, %v834, 1.0
      %v836 = vld [vmem:[%s3] sm:$0xff]
      %v837 = vld [vmem:[%s3 + $0x8] sm:$0xff]
      %v838 = vld [vmem:[%s3 + $0x10] sm:$0xff]
      %v839 = vld [vmem:[%s3 + $0x18] sm:$0xff]
      %v840 = vld [vmem:[%s3 + $0x20] sm:$0xff]
      %v841 = vld [vmem:[%s3 + $0x28] sm:$0xff]
      %v842 = vld [vmem:[%s3 + $0x30] sm:$0xff]
      %v843 = vld [vmem:[%s3 + $0x38] sm:$0xff]
      %v844 = vld [vmem:[%s3 + $0x40] sm:$0x1]
      %v846 = vsel %vm612, %v835, 0
      %v849 = vsel %vm491, %v844, 0
      %851 = vmatprep.subr.mxu0 0.0
      %852 = vmatpush1.msra.mxu0 0.0
      %853 = vmatprep.subr.mxu0 0.0
      %854 = vmatpush1.msra.mxu0 0.0
      %855 = vmatprep.subr.mxu0 0.0
      %856 = vmatpush1.msra.mxu0 0.0
      %857 = vmatprep.subr.mxu0 0.0
      %858 = vmatpush1.msra.mxu0 0.0
      %859 = vmatprep.subr.mxu0 0.0
      %860 = vmatpush1.msra.mxu0 0.0
      %861 = vmatprep.subr.mxu0 0.0
      %862 = vmatpush1.msra.mxu0 0.0
      %863 = vmatprep.subr.mxu0 0.0
      %864 = vmatpush1.msra.mxu0 0.0
      %865 = vmatprep.subr.mxu0 0.0
      %866 = vmatpush1.msra.mxu0 %v849
      %867 = vmatprep.subr.mxu0 0.0
      %868 = vmatpush1.msra.mxu0 %v843
      %869 = vmatprep.subr.mxu0 0.0
      %870 = vmatpush1.msra.mxu0 %v842
      %871 = vmatprep.subr.mxu0 0.0
      %872 = vmatpush1.msra.mxu0 %v841
      %873 = vmatprep.subr.mxu0 0.0
      %874 = vmatpush1.msra.mxu0 %v840
      %875 = vmatprep.subr.mxu0 0.0
      %876 = vmatpush1.msra.mxu0 %v839
      %877 = vmatprep.subr.mxu0 0.0
      %878 = vmatpush1.msra.mxu0 %v838
      %879 = vmatprep.subr.mxu0 0.0
      %880 = vmatpush1.msra.mxu0 %v837
      %881 = vmatprep.subr.mxu0 0.0
      %882 = vmatpush1.msra.mxu0 %v836
      %883 = vmatprep.subr.mxu0 0.0
      %884 = vmatpush2.msra.mxu0 0.0
      %885 = vmatprep.subr.mxu0 0.0
      %886 = vmatpush2.msra.mxu0 0.0
      %887 = vmatprep.subr.mxu0 0.0
      %888 = vmatpush2.msra.mxu0 0.0
      %889 = vmatprep.subr.mxu0 0.0
      %890 = vmatpush2.msra.mxu0 0.0
      %891 = vmatprep.subr.mxu0 0.0
      %892 = vmatpush2.msra.mxu0 0.0
      %893 = vmatprep.subr.mxu0 0.0
      %894 = vmatpush2.msra.mxu0 0.0
      %895 = vmatprep.subr.mxu0 0.0
      %896 = vmatpush2.msra.mxu0 0.0
      %897 = vmatprep.subr.mxu0 0.0
      %898 = vmatpush2.msra.mxu0 0.0
      %899 = vmatprep.subr.mxu0 0.0
      %900 = vmatpush2.msra.mxu0 0.0
      %901 = vmatprep.subr.mxu0 0.0
      %902 = vmatpush2.msra.mxu0 0.0
      %903 = vmatprep.subr.mxu0 0.0
      %904 = vmatpush2.msra.mxu0 0.0
      %905 = vmatprep.subr.mxu0 0.0
      %906 = vmatpush2.msra.mxu0 0.0
      %907 = vmatprep.subr.mxu0 0.0
      %908 = vmatpush2.msra.mxu0 0.0
      %909 = vmatprep.subr.mxu0 0.0
      %910 = vmatpush2.msra.mxu0 0.0
      %911 = vmatprep.subr.mxu0 0.0
      %912 = vmatpush2.msra.mxu0 0.0
      %913 = vmatprep.subr.mxu0 0.0
      %914 = vmatpush2.msra.mxu0 0.0
      %915 = vmatprep.mubr.f32.mxu0 0.0
      %916 = vmatmul.mubr.f32.gmra.mxu0 %v846
      %v917 = vpop.f32.mrf.mxu0
      %v918 = vadd.f32 0.0, %v917
      %v919 = vpop.f32.mrf.mxu0
      %920 = vdwg.mxu0
      %v921 = vxor.u32 %v918, 2147483648
      %v922 = vmul.f32 %v921, 1.442695
      %v923 = vpow.pop %v922
      %v924 = vadd.f32 %v923, 1.0
      %v925 = vrcp.pop %v924
      %v926 = vmul.f32 1.0, %v925
      %928 = vrot.lane.b32.xlu0 %v918, 32
      %v929 = vpop.permute.xlu0 %928
      %v931 = vmul.f32 %v926, %v929
      %933 = vrot.lane.b32.xlu0 %v931, 64
      %v934 = vpop.permute.xlu0 %933
      %v936 = vadd.f32 %v918, %v934
      %v937 = vtanh.pop %v936
      %v938 = vsub.f32 1.0, %v926
      %940 = vrot.lane.b32.xlu0 %v937, 96
      %v941 = vpop.permute.xlu0 %940
      %v943 = vmul.f32 %v938, %v941
      %v944 = vmul.f32 %v926, %v589
      %v945 = vadd.f32 %v943, %v944
      %947 = vrot.lane.b32.xlu0 %v945, 96
      %v948 = vpop.permute.xlu0 %947
      %950 = vst.msk [vmem:[#allocation2] sm:$0xff] %vm591, %v948
      %v951 = vsel %vm591, %v948, 1.0
      %v952 = vld [vmem:[%s4] sm:$0xff]
      %v953 = vld [vmem:[%s4 + $0x8] sm:$0xff]
      %v954 = vld [vmem:[%s4 + $0x10] sm:$0xff]
      %v955 = vld [vmem:[%s4 + $0x18] sm:$0xff]
      %v956 = vld [vmem:[%s4 + $0x20] sm:$0x1]
      %vm957 = vcmask 269312
      %v959 = vsel %vm957, %v951, 0
      %v962 = vsel %vm491, %v956, 0
      %964 = vmatprep.subr.mxu0 0.0
      %965 = vmatpush1.msra.mxu0 0.0
      %966 = vmatprep.subr.mxu0 0.0
      %967 = vmatpush1.msra.mxu0 0.0
      %968 = vmatprep.subr.mxu0 0.0
      %969 = vmatpush1.msra.mxu0 0.0
      %970 = vmatprep.subr.mxu0 0.0
      %971 = vmatpush1.msra.mxu0 0.0
      %972 = vmatprep.subr.mxu0 0.0
      %973 = vmatpush1.msra.mxu0 0.0
      %974 = vmatprep.subr.mxu0 0.0
      %975 = vmatpush1.msra.mxu0 0.0
      %976 = vmatprep.subr.mxu0 0.0
      %977 = vmatpush1.msra.mxu0 0.0
      %978 = vmatprep.subr.mxu0 0.0
      %979 = vmatpush1.msra.mxu0 0.0
      %980 = vmatprep.subr.mxu0 0.0
      %981 = vmatpush1.msra.mxu0 0.0
      %982 = vmatprep.subr.mxu0 0.0
      %983 = vmatpush1.msra.mxu0 0.0
      %984 = vmatprep.subr.mxu0 0.0
      %985 = vmatpush1.msra.mxu0 0.0
      %986 = vmatprep.subr.mxu0 0.0
      %987 = vmatpush1.msra.mxu0 %v962
      %988 = vmatprep.subr.mxu0 0.0
      %989 = vmatpush1.msra.mxu0 %v955
      %990 = vmatprep.subr.mxu0 0.0
      %991 = vmatpush1.msra.mxu0 %v954
      %992 = vmatprep.subr.mxu0 0.0
      %993 = vmatpush1.msra.mxu0 %v953
      %994 = vmatprep.subr.mxu0 0.0
      %995 = vmatpush1.msra.mxu0 %v952
      %996 = vmatprep.subr.mxu0 0.0
      %997 = vmatpush2.msra.mxu0 0.0
      %998 = vmatprep.subr.mxu0 0.0
      %999 = vmatpush2.msra.mxu0 0.0
      %1000 = vmatprep.subr.mxu0 0.0
      %1001 = vmatpush2.msra.mxu0 0.0
      %1002 = vmatprep.subr.mxu0 0.0
      %1003 = vmatpush2.msra.mxu0 0.0
      %1004 = vmatprep.subr.mxu0 0.0
      %1005 = vmatpush2.msra.mxu0 0.0
      %1006 = vmatprep.subr.mxu0 0.0
      %1007 = vmatpush2.msra.mxu0 0.0
      %1008 = vmatprep.subr.mxu0 0.0
      %1009 = vmatpush2.msra.mxu0 0.0
      %1010 = vmatprep.subr.mxu0 0.0
      %1011 = vmatpush2.msra.mxu0 0.0
      %1012 = vmatprep.subr.mxu0 0.0
      %1013 = vmatpush2.msra.mxu0 0.0
      %1014 = vmatprep.subr.mxu0 0.0
      %1015 = vmatpush2.msra.mxu0 0.0
      %1016 = vmatprep.subr.mxu0 0.0
      %1017 = vmatpush2.msra.mxu0 0.0
      %1018 = vmatprep.subr.mxu0 0.0
      %1019 = vmatpush2.msra.mxu0 0.0
      %1020 = vmatprep.subr.mxu0 0.0
      %1021 = vmatpush2.msra.mxu0 0.0
      %1022 = vmatprep.subr.mxu0 0.0
      %1023 = vmatpush2.msra.mxu0 0.0
      %1024 = vmatprep.subr.mxu0 0.0
      %1025 = vmatpush2.msra.mxu0 0.0
      %1026 = vmatprep.subr.mxu0 0.0
      %1027 = vmatpush2.msra.mxu0 0.0
      %1028 = vmatprep.mubr.f32.mxu0 0.0
      %1029 = vmatmul.mubr.f32.gmra.mxu0 %v959
      %v1030 = vpop.f32.mrf.mxu0
      %v1031 = vadd.f32 0.0, %v1030
      %v1032 = vpop.f32.mrf.mxu0
      %1033 = vdwg.mxu0
      %v1034 = vsel %vm513, %v1031, -inf
      %1035 = vmax.xlane.f32.xlu0 %v1034
      %v1036 = vpop.xlane.xlu0 %1035
      %v1037 = vsub.f32 %v1031, %v1036
      %v1038 = vmul.f32 %v1037, 1.442695
      %v1039 = vpow.pop %v1038
      %v1040 = vsel %vm513, %v1039, 0.0
      %1041 = vadd.xlane.f32.xlu0 %v1040
      %v1042 = vpop.xlane.xlu0 %1041
      %v1043 = vlog2.pop %v1042
      %v1044 = vmul.f32 %v1043, 0.6931472
      %v1045 = vadd.f32 %v1036, %v1044
      %v1046 = vsub.f32 %v1031, %v1045
      %1047 = vrot.lane.b32.xlu0 %v945, 32
      %v1048 = vpop.permute.xlu0 %1047
      %1050 = vrot.lane.b32.xlu0 %v704, 96
      %v1051 = vpop.permute.xlu0 %1050
      %v1053 = vsel %vm513, %v1046, %v1048
      %vm1054 = vcmask 785408
      %v1055 = vsel %vm1054, %v1053, %v1051
      %vm1056 = vcmask 867328
      %v1057 = vsel %vm1056, %v1055, 0.0
      %1058 = vst [vmem:[%s263] sm:$0xff] %v1057
      %p1059 = scmp.lt.s32.totalorder %s25, 5
      %s1060 = scalar_select %p1059, %s25, 5
      %s1061 = smul.addr %s1060, 8
      %s1062 = scalar_lea.vmem %s8, %s1061
      // Predicated region
      $region53: #{attn_decoder_forward.1} parent=47 // pred_check
        %p1063 = pneg %p190
      $region54: #{attn_decoder_forward.1} parent=47 // pred_check_branch
        %1065 = sbr.rel (%p1063) target = $region56
      $region55: #{attn_decoder_forward.1} parent=47 // pred_region
        _
      $region56: #{attn_decoder_forward.1} parent=47 // pred_fallthru
        _
    $region48: #{attn_decoder_forward.1} parent=5 // pred_fallthru
      _
    %p1066 = scmp.le.s32.totalorder 2, %s20
    // Predicated region
    $region57: #{attn_decoder_forward.1} parent=5 // pred_check
      %p1067 = pneg %p1066
    $region58: #{attn_decoder_forward.1} parent=5 // pred_check_branch
      %1069 = sbr.rel (%p1067) target = $region60
    $region59: #{attn_decoder_forward.1} parent=5 // pred_region
      %s1070 = ssub.s32 %s20, 2
      // Predicated region
      $region61: #{attn_decoder_forward.1} parent=59 // pred_check
        %p1071 = pneg %p196
      $region62: #{attn_decoder_forward.1} parent=59 // pred_check_branch
        %1073 = sbr.rel (%p1071) target = $region64
      $region63: #{attn_decoder_forward.1} parent=59 // pred_region
        %p1074 = scmp.lt.s32.totalorder %s26, 5
        %s1075 = scalar_select %p1074, %s26, 5
        %s1076 = smul.addr %s1075, 8
        %s1077 = scalar_lea.vmem %s8, %s1076
      $region64: #{attn_decoder_forward.1} parent=59 // pred_fallthru
        _
    $region60: #{attn_decoder_forward.1} parent=5 // pred_fallthru
      _
  $region6: #{attn_decoder_forward.1} parent=0 // loop_footer
    %s24 = sadd.s32 1, %s20
  $region7: #{attn_decoder_forward.1} parent=0 // loop_footer_branch
    %19 = sbr.rel target = $region3
  $region8: #{attn_decoder_forward.1} parent=0 // loop_exit
    _

</llo_original>
